<compile_context>
chip_gen: v7x
topology: tpu7x:2x2x1
jax: 0.10.0
libtpu: 0.0.40
codegen_flags: <defaults>
</compile_context>

<pallas_src>
import functools

import jax
import jax.numpy as jnp
from jax.experimental import pallas as pl
from jax.experimental.pallas import tpu as pltpu


def _round_up(a, b):
    return (a + b - 1) // b * b


def _sinusoid_encoding(max_len, d_model):
    """Sinusoidal positional encoding table [max_len, d_model] (plain JAX glue)."""
    pos = jnp.arange(max_len, dtype=jnp.float32)[:, None]            # (max_len, 1)
    i2 = jnp.arange(0, d_model, 2, dtype=jnp.float32)                # (d_model/2,)
    angles = pos / jnp.power(10000.0, i2 / float(d_model))           # (max_len, d/2)
    enc = jnp.zeros((max_len, d_model), dtype=jnp.float32)
    enc = enc.at[:, 0::2].set(jnp.sin(angles))
    enc = enc.at[:, 1::2].set(jnp.cos(angles))
    return enc


# --------------------------------------------------------------------------- #
# Path A: large vocab -- table stays in HBM, manual row-gather DMAs.
# --------------------------------------------------------------------------- #
def _hbm_gather_kernel(ids_ref, emb_hbm, pos_ref, out_ref, sems, *,
                       seq_len, ts, n_sub, unroll, vocab):
    # ids_ref : SMEM [B*S_pad] int32      (scalar prefetch)
    # emb_hbm : HBM  [V, D]               (memory_space=pl.ANY, raw ref)
    # pos_ref : VMEM [ts, D]              (constant across the inner batch axis)
    # out_ref : VMEM [ts, D]              (gather lands here directly)
    # sems    : DMA semaphores, 2 slots (one per in-flight sub-tile)
    s = pl.program_id(0)
    b = pl.program_id(1)
    base = b * seq_len + s * ts
    ts_sub = ts // n_sub

    def issue(sub, slot):
        sub_base = base + sub * ts_sub
        row0 = sub * ts_sub

        # Partially-unrolled issue loop: `unroll` descriptors per loop body so the
        # scalar address math co-issues with the vector-misc DMA pushes.
        @pl.loop(0, ts_sub // unroll)
        def _(i):
            r = i * unroll
            for u in range(unroll):
                tok = jnp.clip(ids_ref[sub_base + r + u], 0, vocab - 1)
                pltpu.make_async_copy(
                    emb_hbm.at[pl.ds(tok, 1), :],
                    out_ref.at[pl.ds(row0 + r + u, 1), :],
                    sems.at[slot],
                ).start()

    def wait_and_add(sub, slot):
        row0 = sub * ts_sub
        dst = out_ref.at[pl.ds(row0, ts_sub), :]
        # Single aggregated wait: one descriptor whose byte count equals the sum of
        # all row DMAs of this sub-tile (per perf review).
        src = emb_hbm.at[pl.ds(0, ts_sub), :] if vocab >= ts_sub else dst
        pltpu.make_async_copy(src, dst, sems.at[slot]).wait()
        out_ref[pl.ds(row0, ts_sub), :] += pos_ref[pl.ds(row0, ts_sub), :]

    # Software-pipelined sub-tiles: issue sub j+1 before waiting on sub j so the
    # DMA engine stays busy during every wait/add phase.  All DMAs are waited in
    # this same invocation, so the semaphores are fully drained (megacore-safe).
    issue(0, 0)
    for j in range(n_sub):
        if j + 1 < n_sub:
            issue(j + 1, (j + 1) % 2)
        wait_and_add(j, j % 2)


# --------------------------------------------------------------------------- #
# Path B: small vocab*d_model -- table resident in VMEM, dynamic VMEM loads.
# --------------------------------------------------------------------------- #
def _vmem_gather_kernel(ids_ref, emb_ref, pos_ref, out_ref, *,
                        seq_len, ts, unroll, vocab):
    # emb_ref : VMEM [V, D] (constant index_map -> streamed from HBM once)
    s = pl.program_id(0)
    b = pl.program_id(1)
    base = b * seq_len + s * ts

    @pl.loop(0, ts // unroll)
    def _(i):
        r = i * unroll
        for u in range(unroll):
            tok = jnp.clip(ids_ref[base + r + u], 0, vocab - 1)
            out_ref[pl.ds(r + u, 1), :] = emb_ref[pl.ds(tok, 1), :]

    out_ref[...] += pos_ref[...]


def transformer_embedding(x, emb_table, max_len, drop_prob, *,
                          seq_tile=512, force_hbm_gather=False):
    """
    x         : [B, S] int32 token ids
    emb_table : [V, D] embedding weights (f32 or bf16; row 1 zeroed -> padding_idx=1)
    returns   : [B, S, D] in emb_table.dtype
    """
    B, S = x.shape
    V, D = emb_table.shape
    assert S <= max_len
    dtype = emb_table.dtype
    elt = jnp.dtype(dtype).itemsize

    # --- tile sizing: multiple of 8 rows, capped so 2x(out)+2x(pos) buffers fit VMEM.
    ts = min(seq_tile, _round_up(S, 8))
    max_rows = max(8, ((24 << 20) // (4 * D * elt)) // 8 * 8)
    ts = max(8, (min(ts, max_rows) // 8) * 8)
    S_pad = _round_up(S, ts)                 # pad S instead of shrinking ts (review fix)
    n_s = S_pad // ts

    # Sub-tiling / unroll of the gather loop.
    n_sub = 2 if ts % 16 == 0 else 1
    ts_sub = ts // n_sub
    unroll = 8                               # ts_sub is always a multiple of 8

    # Positional encoding [S_pad, D]; rows beyond S are discarded by the final slice.
    pos = _sinusoid_encoding(max_len, D)[:S]
    pos = jnp.pad(pos, ((0, S_pad - S), (0, 0))).astype(dtype)

    # Token ids, padded and flattened for SMEM scalar prefetch (clip happens in-kernel).
    # TODO(synk): for very large B*S (>~256K tokens) the SMEM id prefetch should be
    # chunked per sequence tile instead of one flat array.
    ids = jnp.pad(x.astype(jnp.int32), ((0, 0), (0, S_pad - S))).reshape(B * S_pad)

    table_bytes = V * D * elt
    use_vmem_table = (table_bytes <= (8 << 20)) and not force_hbm_gather

    vmem_bytes = 4 * ts * D * elt + (2 * table_bytes if use_vmem_table else 0) + (2 << 20)
    cparams = pltpu.CompilerParams(
        dimension_semantics=("parallel", "parallel"),          # v7x: split on seq AND batch
        vmem_limit_bytes=int(max(vmem_bytes, 16 << 20)),
    )

    if use_vmem_table:
        kernel = functools.partial(_vmem_gather_kernel, seq_len=S_pad, ts=ts,
                                   unroll=unroll, vocab=V)
        in_specs = [
            pl.BlockSpec((V, D), lambda si, bi, _ids: (0, 0)),   # whole table, fetched once
            pl.BlockSpec((ts, D), lambda si, bi, _ids: (si, 0)),  # pos, constant over batch
        ]
        scratch = []
    else:
        kernel = functools.partial(_hbm_gather_kernel, seq_len=S_pad, ts=ts,
                                   n_sub=n_sub, unroll=unroll, vocab=V)
        in_specs = [
            pl.BlockSpec(memory_space=pl.ANY),                   # table stays in HBM
            pl.BlockSpec((ts, D), lambda si, bi, _ids: (si, 0)),
        ]
        scratch = [pltpu.SemaphoreType.DMA((2,))]                # one aggregated sem per sub-tile slot

    out = pl.pallas_call(
        kernel,
        out_shape=jax.ShapeDtypeStruct((B * S_pad, D), dtype),
        grid_spec=pltpu.PrefetchScalarGridSpec(
            num_scalar_prefetch=1,
            grid=(n_s, B),
            in_specs=in_specs,
            out_specs=pl.BlockSpec((ts, D), lambda si, bi, _ids: (bi * n_s + si, 0)),
            scratch_shapes=scratch,
        ),
        compiler_params=cparams,
    )(ids, emb_table, pos)

    out = out.reshape(B, S_pad, D)[:, :S, :]
    # TODO(synk): nn.Dropout is the identity in eval mode (implemented here); training-mode
    # dropout would use pltpu.prng_seed + pltpu.prng_random_bits in-kernel.
    return out


if __name__ == "__main__":
    B, S, D = 2, 8, 128          # num_sample, seq_len, d_model
    V, MAX_LEN = 64, 16          # vocab_size, max_len
    DROP_PROB = 0.1

    key = jax.random.PRNGKey(0)
    k_ids, k_emb, k_ids2 = jax.random.split(key, 3)

    x = jax.random.randint(k_ids, (B, S), 0, V, dtype=jnp.int32)
    emb_table = jax.random.normal(k_emb, (V, D), dtype=jnp.float32)
    emb_table = emb_table.at[1].set(0.0)   # nn.Embedding(padding_idx=1)

    enc = _sinusoid_encoding(MAX_LEN, D)
    ref = emb_table[x] + enc[:S][None, :, :]

    # Fast path: table resident in VMEM (small vocab * d_model).
    out_fast = jax.block_until_ready(
        transformer_embedding(x, emb_table, MAX_LEN, DROP_PROB))
    assert out_fast.shape == (B, S, D) and out_fast.dtype == jnp.float32
    assert jnp.allclose(out_fast, ref, atol=1e-5), "VMEM-table path mismatch"

    # Large-vocab path: table in HBM, manual row-gather DMAs with aggregated waits.
    out_hbm = jax.block_until_ready(
        transformer_embedding(x, emb_table, MAX_LEN, DROP_PROB, force_hbm_gather=True))
    assert jnp.allclose(out_hbm, ref, atol=1e-5), "HBM-gather path mismatch"

    # Non-multiple-of-8 seq_len: exercises the pad-S path and 2-stage sub-tile pipeline.
    S2 = 13
    x2 = jax.random.randint(k_ids2, (B, S2), 0, V, dtype=jnp.int32)
    ref2 = emb_table[x2] + enc[:S2][None, :, :]
    out2 = jax.block_until_ready(
        transformer_embedding(x2, emb_table, MAX_LEN, DROP_PROB, force_hbm_gather=True))
    assert out2.shape == (B, S2, D)
    assert jnp.allclose(out2, ref2, atol=1e-5), "padded-S HBM path mismatch"

    print("KERNEL_OK")
</pallas_src>

<mosaic_0001>
module attributes {stable_mosaic.version = 11 : i64} {
  func.func @_vmem_gather_kernel(%arg0: i32, %arg1: i32, %arg2: memref<16xi32, #tpu.memory_space<smem>>, %arg3: memref<64x128xf32, #tpu.memory_space<vmem>>, %arg4: memref<8x128xf32, #tpu.memory_space<vmem>>, %arg5: memref<8x128xf32, #tpu.memory_space<vmem>>) attributes {dimension_semantics = [#tpu.dimension_semantics<parallel>, #tpu.dimension_semantics<parallel>], iteration_bounds = array<i64: 1, 2>, scalar_prefetch = 1 : i64, scratch_operands = 0 : i64, tpu.core_type = #tpu.core_type<tc>, window_params = [{pipeline_mode = #tpu.pipeline_mode<synchronous>, transform_indices = @transform_0, window_bounds = array<i64: 64, 128>}, {transform_indices = @transform_1, window_bounds = array<i64: 8, 128>}, {transform_indices = @transform_2, window_bounds = array<i64: 8, 128>}]} {
    %c8_i32 = arith.constant 8 : i32
    %0 = arith.muli %arg1, %c8_i32 : i32
    %c8_i32_0 = arith.constant 8 : i32
    %1 = arith.muli %arg0, %c8_i32_0 : i32
    %2 = arith.addi %0, %1 : i32
    %c0_i32 = arith.constant 0 : i32
    %c1_i32 = arith.constant 1 : i32
    %3 = arith.muli %c0_i32, %c1_i32 : i32
    %c0_i32_1 = arith.constant 0 : i32
    %4 = arith.addi %c0_i32_1, %3 : i32
    %c8_i32_2 = arith.constant 8 : i32
    %5 = arith.muli %4, %c8_i32_2 : i32
    %6 = arith.addi %2, %5 : i32
    %c0_i32_3 = arith.constant 0 : i32
    %7 = arith.addi %6, %c0_i32_3 : i32
    %8 = arith.index_cast %7 : i32 to index
    %9 = memref.load %arg2[%8] : memref<16xi32, #tpu.memory_space<smem>>
    %c0_i32_4 = arith.constant 0 : i32
    %c63_i32 = arith.constant 63 : i32
    %10 = arith.maxsi %c0_i32_4, %9 : i32
    %11 = arith.minsi %c63_i32, %10 : i32
    %12 = arith.index_cast %11 : i32 to index
    %c0 = arith.constant 0 : index
    %13 = vector.load %arg3[%12, %c0] : memref<64x128xf32, #tpu.memory_space<vmem>>, vector<1x128xf32>
    %c0_i32_5 = arith.constant 0 : i32
    %14 = arith.addi %5, %c0_i32_5 : i32
    %15 = arith.index_cast %14 : i32 to index
    %c0_6 = arith.constant 0 : index
    %16 = vector.load %arg5[%15, %c0_6] : memref<8x128xf32, #tpu.memory_space<vmem>>, vector<1x128xf32>
    tpu.vector_store %arg5[%15, %c0_6], %13 {strides = array<i32>} : memref<8x128xf32, #tpu.memory_space<vmem>>, vector<1x128xf32>,
    %17 = arith.addi %2, %5 : i32
    %c1_i32_7 = arith.constant 1 : i32
    %18 = arith.addi %17, %c1_i32_7 : i32
    %19 = arith.index_cast %18 : i32 to index
    %20 = memref.load %arg2[%19] : memref<16xi32, #tpu.memory_space<smem>>
    %c0_i32_8 = arith.constant 0 : i32
    %c63_i32_9 = arith.constant 63 : i32
    %21 = arith.maxsi %c0_i32_8, %20 : i32
    %22 = arith.minsi %c63_i32_9, %21 : i32
    %23 = arith.index_cast %22 : i32 to index
    %c0_10 = arith.constant 0 : index
    %24 = vector.load %arg3[%23, %c0_10] : memref<64x128xf32, #tpu.memory_space<vmem>>, vector<1x128xf32>
    %c1_i32_11 = arith.constant 1 : i32
    %25 = arith.addi %5, %c1_i32_11 : i32
    %26 = arith.index_cast %25 : i32 to index
    %c0_12 = arith.constant 0 : index
    %27 = vector.load %arg5[%26, %c0_12] : memref<8x128xf32, #tpu.memory_space<vmem>>, vector<1x128xf32>
    tpu.vector_store %arg5[%26, %c0_12], %24 {strides = array<i32>} : memref<8x128xf32, #tpu.memory_space<vmem>>, vector<1x128xf32>,
    %28 = arith.addi %2, %5 : i32
    %c2_i32 = arith.constant 2 : i32
    %29 = arith.addi %28, %c2_i32 : i32
    %30 = arith.index_cast %29 : i32 to index
    %31 = memref.load %arg2[%30] : memref<16xi32, #tpu.memory_space<smem>>
    %c0_i32_13 = arith.constant 0 : i32
    %c63_i32_14 = arith.constant 63 : i32
    %32 = arith.maxsi %c0_i32_13, %31 : i32
    %33 = arith.minsi %c63_i32_14, %32 : i32
    %34 = arith.index_cast %33 : i32 to index
    %c0_15 = arith.constant 0 : index
    %35 = vector.load %arg3[%34, %c0_15] : memref<64x128xf32, #tpu.memory_space<vmem>>, vector<1x128xf32>
    %c2_i32_16 = arith.constant 2 : i32
    %36 = arith.addi %5, %c2_i32_16 : i32
    %37 = arith.index_cast %36 : i32 to index
    %c0_17 = arith.constant 0 : index
    %38 = vector.load %arg5[%37, %c0_17] : memref<8x128xf32, #tpu.memory_space<vmem>>, vector<1x128xf32>
    tpu.vector_store %arg5[%37, %c0_17], %35 {strides = array<i32>} : memref<8x128xf32, #tpu.memory_space<vmem>>, vector<1x128xf32>,
    %39 = arith.addi %2, %5 : i32
    %c3_i32 = arith.constant 3 : i32
    %40 = arith.addi %39, %c3_i32 : i32
    %41 = arith.index_cast %40 : i32 to index
    %42 = memref.load %arg2[%41] : memref<16xi32, #tpu.memory_space<smem>>
    %c0_i32_18 = arith.constant 0 : i32
    %c63_i32_19 = arith.constant 63 : i32
    %43 = arith.maxsi %c0_i32_18, %42 : i32
    %44 = arith.minsi %c63_i32_19, %43 : i32
    %45 = arith.index_cast %44 : i32 to index
    %c0_20 = arith.constant 0 : index
    %46 = vector.load %arg3[%45, %c0_20] : memref<64x128xf32, #tpu.memory_space<vmem>>, vector<1x128xf32>
    %c3_i32_21 = arith.constant 3 : i32
    %47 = arith.addi %5, %c3_i32_21 : i32
    %48 = arith.index_cast %47 : i32 to index
    %c0_22 = arith.constant 0 : index
    %49 = vector.load %arg5[%48, %c0_22] : memref<8x128xf32, #tpu.memory_space<vmem>>, vector<1x128xf32>
    tpu.vector_store %arg5[%48, %c0_22], %46 {strides = array<i32>} : memref<8x128xf32, #tpu.memory_space<vmem>>, vector<1x128xf32>,
    %50 = arith.addi %2, %5 : i32
    %c4_i32 = arith.constant 4 : i32
    %51 = arith.addi %50, %c4_i32 : i32
    %52 = arith.index_cast %51 : i32 to index
    %53 = memref.load %arg2[%52] : memref<16xi32, #tpu.memory_space<smem>>
    %c0_i32_23 = arith.constant 0 : i32
    %c63_i32_24 = arith.constant 63 : i32
    %54 = arith.maxsi %c0_i32_23, %53 : i32
    %55 = arith.minsi %c63_i32_24, %54 : i32
    %56 = arith.index_cast %55 : i32 to index
    %c0_25 = arith.constant 0 : index
    %57 = vector.load %arg3[%56, %c0_25] : memref<64x128xf32, #tpu.memory_space<vmem>>, vector<1x128xf32>
    %c4_i32_26 = arith.constant 4 : i32
    %58 = arith.addi %5, %c4_i32_26 : i32
    %59 = arith.index_cast %58 : i32 to index
    %c0_27 = arith.constant 0 : index
    %60 = vector.load %arg5[%59, %c0_27] : memref<8x128xf32, #tpu.memory_space<vmem>>, vector<1x128xf32>
    tpu.vector_store %arg5[%59, %c0_27], %57 {strides = array<i32>} : memref<8x128xf32, #tpu.memory_space<vmem>>, vector<1x128xf32>,
    %61 = arith.addi %2, %5 : i32
    %c5_i32 = arith.constant 5 : i32
    %62 = arith.addi %61, %c5_i32 : i32
    %63 = arith.index_cast %62 : i32 to index
    %64 = memref.load %arg2[%63] : memref<16xi32, #tpu.memory_space<smem>>
    %c0_i32_28 = arith.constant 0 : i32
    %c63_i32_29 = arith.constant 63 : i32
    %65 = arith.maxsi %c0_i32_28, %64 : i32
    %66 = arith.minsi %c63_i32_29, %65 : i32
    %67 = arith.index_cast %66 : i32 to index
    %c0_30 = arith.constant 0 : index
    %68 = vector.load %arg3[%67, %c0_30] : memref<64x128xf32, #tpu.memory_space<vmem>>, vector<1x128xf32>
    %c5_i32_31 = arith.constant 5 : i32
    %69 = arith.addi %5, %c5_i32_31 : i32
    %70 = arith.index_cast %69 : i32 to index
    %c0_32 = arith.constant 0 : index
    %71 = vector.load %arg5[%70, %c0_32] : memref<8x128xf32, #tpu.memory_space<vmem>>, vector<1x128xf32>
    tpu.vector_store %arg5[%70, %c0_32], %68 {strides = array<i32>} : memref<8x128xf32, #tpu.memory_space<vmem>>, vector<1x128xf32>,
    %72 = arith.addi %2, %5 : i32
    %c6_i32 = arith.constant 6 : i32
    %73 = arith.addi %72, %c6_i32 : i32
    %74 = arith.index_cast %73 : i32 to index
    %75 = memref.load %arg2[%74] : memref<16xi32, #tpu.memory_space<smem>>
    %c0_i32_33 = arith.constant 0 : i32
    %c63_i32_34 = arith.constant 63 : i32
    %76 = arith.maxsi %c0_i32_33, %75 : i32
    %77 = arith.minsi %c63_i32_34, %76 : i32
    %78 = arith.index_cast %77 : i32 to index
    %c0_35 = arith.constant 0 : index
    %79 = vector.load %arg3[%78, %c0_35] : memref<64x128xf32, #tpu.memory_space<vmem>>, vector<1x128xf32>
    %c6_i32_36 = arith.constant 6 : i32
    %80 = arith.addi %5, %c6_i32_36 : i32
    %81 = arith.index_cast %80 : i32 to index
    %c0_37 = arith.constant 0 : index
    %82 = vector.load %arg5[%81, %c0_37] : memref<8x128xf32, #tpu.memory_space<vmem>>, vector<1x128xf32>
    tpu.vector_store %arg5[%81, %c0_37], %79 {strides = array<i32>} : memref<8x128xf32, #tpu.memory_space<vmem>>, vector<1x128xf32>,
    %83 = arith.addi %2, %5 : i32
    %c7_i32 = arith.constant 7 : i32
    %84 = arith.addi %83, %c7_i32 : i32
    %85 = arith.index_cast %84 : i32 to index
    %86 = memref.load %arg2[%85] : memref<16xi32, #tpu.memory_space<smem>>
    %c0_i32_38 = arith.constant 0 : i32
    %c63_i32_39 = arith.constant 63 : i32
    %87 = arith.maxsi %c0_i32_38, %86 : i32
    %88 = arith.minsi %c63_i32_39, %87 : i32
    %89 = arith.index_cast %88 : i32 to index
    %c0_40 = arith.constant 0 : index
    %90 = vector.load %arg3[%89, %c0_40] : memref<64x128xf32, #tpu.memory_space<vmem>>, vector<1x128xf32>
    %c7_i32_41 = arith.constant 7 : i32
    %91 = arith.addi %5, %c7_i32_41 : i32
    %92 = arith.index_cast %91 : i32 to index
    %c0_42 = arith.constant 0 : index
    %93 = vector.load %arg5[%92, %c0_42] : memref<8x128xf32, #tpu.memory_space<vmem>>, vector<1x128xf32>
    tpu.vector_store %arg5[%92, %c0_42], %90 {strides = array<i32>} : memref<8x128xf32, #tpu.memory_space<vmem>>, vector<1x128xf32>,
    %c1_i32_43 = arith.constant 1 : i32
    %c0_44 = arith.constant 0 : index
    %c0_45 = arith.constant 0 : index
    %94 = vector.load %arg5[%c0_44, %c0_45] : memref<8x128xf32, #tpu.memory_space<vmem>>, vector<8x128xf32>
    %c0_46 = arith.constant 0 : index
    %c0_47 = arith.constant 0 : index
    %95 = vector.load %arg4[%c0_46, %c0_47] : memref<8x128xf32, #tpu.memory_space<vmem>>, vector<8x128xf32>
    %96 = arith.addf %94, %95 : vector<8x128xf32>
    %c0_48 = arith.constant 0 : index
    %c0_49 = arith.constant 0 : index
    %97 = vector.load %arg5[%c0_48, %c0_49] : memref<8x128xf32, #tpu.memory_space<vmem>>, vector<8x128xf32>
    tpu.vector_store %arg5[%c0_48, %c0_49], %96 {strides = array<i32>} : memref<8x128xf32, #tpu.memory_space<vmem>>, vector<8x128xf32>,
    return
  }
  func.func @transform_0(%arg0: i32, %arg1: i32, %arg2: memref<16xi32, #tpu.memory_space<smem>>) -> (i32, i32) {
    %c0_i32 = arith.constant 0 : i32
    %c0_i32_0 = arith.constant 0 : i32
    %c0_i32_1 = arith.constant 0 : i32
    return %c0_i32, %c0_i32_0 : i32, i32
  }
  func.func @transform_1(%arg0: i32, %arg1: i32, %arg2: memref<16xi32, #tpu.memory_space<smem>>) -> (i32, i32) {
    %c0_i32 = arith.constant 0 : i32
    %c0_i32_0 = arith.constant 0 : i32
    return %arg0, %c0_i32 : i32, i32
  }
  func.func @transform_2(%arg0: i32, %arg1: i32, %arg2: memref<16xi32, #tpu.memory_space<smem>>) -> (i32, i32) {
    %c1_i32 = arith.constant 1 : i32
    %0 = arith.muli %arg1, %c1_i32 : i32
    %1 = arith.addi %0, %arg0 : i32
    %c0_i32 = arith.constant 0 : i32
    %c0_i32_0 = arith.constant 0 : i32
    return %1, %c0_i32 : i32, i32
  }
}

</mosaic_0001>

<llo_original>
// kernel: tpu_custom_call.1
$region0: #{tpu_custom_call.1}
  #allocation0 [shape = 'u32[]', space=smem, size = 0x4, offset = 0x4, fixed_abs, tag = 'smem constant byte address 0x4 - core index']
  #allocation1 [shape = 'u32[144,128]{1,0:T(1,128)}', space=vmem, size = 0x12000, scoped, tag = 'internal scratch']
  #allocation2 [shape = 's32[1]{0}', space=sflag, size = 0x4, scoped, tag = 'scoped memory for tpu_custom_call.1']
  #allocation3 [shape = 'u8[512]{0}', space=smem, size = 0x200, scoped, tag = 'prefetched SMEM operand 0']
  %s0 = inlined_call_operand.hbm [shape: s32[16], index: 0, kind: input, shape index: {}]
  %s1 = inlined_call_operand.hbm [shape: f32[64,128], index: 1, kind: input, shape index: {}]
  %s2 = inlined_call_operand.hbm [shape: f32[8,128], index: 2, kind: input, shape index: {}]
  %s3 = inlined_call_operand.hbm [shape: f32[16,128], index: 3, kind: output, shape index: {}]
  %s4 = sld [smem:[#allocation0]]
  $region49: #{tpu_custom_call.1} parent=0
    _
  %s6 = ssub.s32 1, %s4
  %s7 = scalar_select 0, %s6, %s4
  %9 = dma.hbm_to_smem %s0, 16, [#allocation3], [#allocation2]
  %10 = dma.done [#allocation2], 16
  %11 = sfence
  $region1: #{tpu_custom_call.1} parent=0
    #allocation4 [shape = 'u8[32768]{0}', space=vmem, size = 0x8000, scoped, tag = 'input window, operand 1, single buffered']
    #allocation5 [shape = 's32[2]{0}', space=sflag, size = 0x8, scoped, tag = 'scoped memory for tpu_custom_call.1']
    #allocation6 [shape = 's32[2]{0}', space=sflag, size = 0x8, scoped, tag = 'scoped memory for tpu_custom_call.1']
    #allocation7 [shape = 'u8[4096]{0}', space=vmem, size = 0x1000, scoped, tag = 'input window, operand 2, single buffered']
    #allocation8 [shape = 's32[1]{0}', space=sflag, size = 0x4, scoped, tag = 'scoped memory for tpu_custom_call.1']
    #allocation9 [shape = 'u8[8192]{0}', space=vmem, size = 0x2000, scoped, tag = 'output window, operand 0']
    %12 = vsyncpa [#allocation5], 0
    %13 = vsyncpa [#allocation8], 0
    %14 = vsyncpa [#allocation6], 0
    %s15 = scalar_lea.sflag [#allocation6], 1
    %16 = vsyncpa %s15, 0
    loop: start=0, step=1, limit=4
    $region2: #{tpu_custom_call.1} parent=1 // loop_pre_header
      _
    $region3: #{tpu_custom_call.1} parent=1 // loop_header
      %s18 = sphi 0, %s22
      %p19 = scmp.ge.s32.totalorder %s18, 4
      %s25 = sphi 0, %s37
      %s26 = sphi 0, %s33
      %s27 = sphi 0, %s25
      %s28 = sphi 0, %s26
      %s29 = sphi 0, %s27
      %s30 = sphi 0, %s28
      %s38 = sphi 0, %s38
      %s40 = sphi 0, %s38
      %s41 = sphi 0, %s40
      %s55 = sphi 0, %s41
      %s61 = sphi 0, %s63
      %s64 = sphi 0, %s61
      %s65 = sphi 0, %s64
      %s81 = sphi 0, %s65
      %s89 = sphi 0, %s91
      %s92 = sphi 0, %s89
      %s93 = sphi 0, %s92
      %s109 = sphi 0, %s93
    $region4: #{tpu_custom_call.1} parent=1 // loop_header_branch
      %21 = sbr.rel (%p19) target = $region8
    $region5: #{tpu_custom_call.1} parent=1 // loop_body
      %s23 = ssub.s32 %s18, 1
      %s24 = ssub.s32 %s18, 2
      %s31 = sadd.s32 1, %s26
      %p32 = scmp.ge.s32.totalorder %s31, 2
      %s33 = scalar_select %p32, 0, %s31
      %s34 = sadd.s32 1, %s25
      %s35 = scalar_select %p32, %s34, %s25
      %p36 = scmp.ge.s32.totalorder %s35, 1
      %s37 = scalar_select %p36, 0, %s35
      %s39 = sadd.s32 %s38, 1
      %p42 = scmp.eq.s32.totalorder %s18, 1
      %p43 = scmp.ne.s32.totalorder %s38, %s40
      %p44 = scmp.eq.s32.totalorder %s18, 0
      %p45 = por %p43, %p44
      %p46 = scmp.ne.s32.totalorder %s38, %s40
      %p47 = scmp.eq.s32.totalorder %s23, 1
      %p48 = por %p46, %p47
      %p49 = scmp.ne.s32.totalorder %s40, %s41
      %p50 = scmp.eq.s32.totalorder %s23, 0
      %p51 = por %p49, %p50
      %p52 = scmp.ne.s32.totalorder %s40, %s41
      %p53 = scmp.eq.s32.totalorder %s24, 1
      %p54 = por %p52, %p53
      %p56 = scmp.ne.s32.totalorder %s41, %s55
      %p57 = scmp.eq.s32.totalorder %s24, 0
      %p58 = por %p56, %p57
      %s59 = ssub.s32 %s25, %s37
      %p60 = scmp.eq.s32.totalorder %s59, 0
      %s62 = sadd.s32 %s61, 1
      %s63 = scalar_select %p60, %s61, %s62
      %p66 = pneg %p60
      %p67 = scmp.eq.s32.totalorder %s18, 1
      %p68 = por %p66, %p67
      %p69 = scmp.ne.s32.totalorder %s61, %s64
      %p70 = scmp.eq.s32.totalorder %s18, 0
      %p71 = por %p69, %p70
      %p72 = scmp.ne.s32.totalorder %s61, %s64
      %p73 = scmp.eq.s32.totalorder %s23, 1
      %p74 = por %p72, %p73
      %p75 = scmp.ne.s32.totalorder %s64, %s65
      %p76 = scmp.eq.s32.totalorder %s23, 0
      %p77 = por %p75, %p76
      %p78 = scmp.ne.s32.totalorder %s64, %s65
      %p79 = scmp.eq.s32.totalorder %s24, 1
      %p80 = por %p78, %p79
      %p82 = scmp.ne.s32.totalorder %s65, %s81
      %p83 = scmp.eq.s32.totalorder %s24, 0
      %p84 = por %p82, %p83
      %s85 = sadd.s32 %s26, %s25
      %s86 = sadd.s32 %s33, %s37
      %s87 = ssub.s32 %s85, %s86
      %p88 = scmp.eq.s32.totalorder %s87, 0
      %s90 = sadd.s32 %s89, 1
      %s91 = scalar_select %p88, %s89, %s90
      %p94 = pneg %p88
      %p95 = scmp.eq.s32.totalorder %s18, 1
      %p96 = por %p94, %p95
      %p97 = scmp.ne.s32.totalorder %s89, %s92
      %p98 = scmp.eq.s32.totalorder %s18, 0
      %p99 = por %p97, %p98
      %p100 = scmp.ne.s32.totalorder %s89, %s92
      %p101 = scmp.eq.s32.totalorder %s23, 1
      %p102 = por %p100, %p101
      %p103 = scmp.ne.s32.totalorder %s92, %s93
      %p104 = scmp.eq.s32.totalorder %s23, 0
      %p105 = por %p103, %p104
      %p106 = scmp.ne.s32.totalorder %s92, %s93
      %p107 = scmp.eq.s32.totalorder %s24, 1
      %p108 = por %p106, %p107
      %p110 = scmp.ne.s32.totalorder %s93, %s109
      %p111 = scmp.eq.s32.totalorder %s24, 0
      %p112 = por %p110, %p111
      %p113 = scmp.le.s32.totalorder 1, %s18
      %p114 = scmp.lt.s32.totalorder %s18, 3
      %p115 = pnand %p113, %p114
      %p116 = pneg %p115
      // Predicated region
      $region9: #{tpu_custom_call.1} parent=5 // pred_check
        _
      $region10: #{tpu_custom_call.1} parent=5 // pred_check_branch
        %118 = sbr.rel (%p115) target = $region12
      $region11: #{tpu_custom_call.1} parent=5 // pred_region
        %s119 = ssub.s32 %s18, 1
        // Predicated region
        $region13: #{tpu_custom_call.1} parent=11 // pred_check
          %p120 = pneg %p51
        $region14: #{tpu_custom_call.1} parent=11 // pred_check_branch
          %122 = sbr.rel (%p120) target = $region16
        $region15: #{tpu_custom_call.1} parent=11 // pred_region
          %s124 = ssub.s32 1024, 1024
          %125 = vsyncadd [#allocation5], %s124
          %s126 = sshll.u32 [#allocation4], 4
          %s127 = int_to_ptr.vmem [resolvable:$true] %s126
          %132 = dma.hbm_to_vmem [thread:$0]  %s1, 1024, %s127, [#allocation5], 128, 128, 8
        $region16: #{tpu_custom_call.1} parent=11 // pred_fallthru
          _
        // Predicated region
        $region17: #{tpu_custom_call.1} parent=11 // pred_check
          %p133 = pneg %p77
        $region18: #{tpu_custom_call.1} parent=11 // pred_check_branch
          %135 = sbr.rel (%p133) target = $region20
        $region19: #{tpu_custom_call.1} parent=11 // pred_region
          %s137 = ssub.s32 128, 128
          %138 = vsyncadd [#allocation8], %s137
          %s139 = smul.addr %s27, 128
          %s140 = scalar_lea.hbm %s2, %s139
          %s142 = sshll.u32 [#allocation7], 4
          %s143 = int_to_ptr.vmem [resolvable:$true] %s142
          %145 = dma.hbm_to_vmem [thread:$0]  %s140, 128, %s143, [#allocation8]
        $region20: #{tpu_custom_call.1} parent=11 // pred_fallthru
          _
      $region12: #{tpu_custom_call.1} parent=5 // pred_fallthru
        _
      %p146 = scmp.lt.s32.totalorder %s18, 2
      // Predicated region
      $region21: #{tpu_custom_call.1} parent=5 // pred_check
        %p147 = pneg %p146
      $region22: #{tpu_custom_call.1} parent=5 // pred_check_branch
        %149 = sbr.rel (%p147) target = $region24
      $region23: #{tpu_custom_call.1} parent=5 // pred_region
        _
      $region24: #{tpu_custom_call.1} parent=5 // pred_fallthru
        _
      %p150 = scmp.le.s32.totalorder 1, %s18
      %p151 = scmp.lt.s32.totalorder %s18, 3
      %p152 = pnand %p150, %p151
      %p153 = pneg %p152
      // Predicated region
      $region25: #{tpu_custom_call.1} parent=5 // pred_check
        _
      $region26: #{tpu_custom_call.1} parent=5 // pred_check_branch
        %155 = sbr.rel (%p152) target = $region28
      $region27: #{tpu_custom_call.1} parent=5 // pred_region
        %s156 = ssub.s32 %s18, 1
        // Predicated region
        $region29: #{tpu_custom_call.1} parent=27 // pred_check
          %p157 = pneg %p51
        $region30: #{tpu_custom_call.1} parent=27 // pred_check_branch
          %159 = sbr.rel (%p157) target = $region32
        $region31: #{tpu_custom_call.1} parent=27 // pred_region
          %160 = dma.done [#allocation5], 1024
        $region32: #{tpu_custom_call.1} parent=27 // pred_fallthru
          _
        // Predicated region
        $region33: #{tpu_custom_call.1} parent=27 // pred_check
          %p161 = pneg %p77
        $region34: #{tpu_custom_call.1} parent=27 // pred_check_branch
          %163 = sbr.rel (%p161) target = $region36
        $region35: #{tpu_custom_call.1} parent=27 // pred_region
          %164 = dma.done [#allocation8], 128
        $region36: #{tpu_custom_call.1} parent=27 // pred_fallthru
          _
        %p165 = pneg %p51
        %p166 = pneg %p48
        %p167 = pneg %p77
        %p168 = pneg %p74
        %p169 = pneg %p105
        %p170 = pneg %p102
        %s171 = sand.u32 %s92, 1
        %s172 = scalar_lea.sflag [#allocation6], %s171
        %s173 = sand.u32 %s92, 1
        %s174 = smul.addr %s173, 8
        %s175 = scalar_lea.vmem [#allocation9], %s174
        %s176 = sadd.s32 %s28, %s27
        %s177 = smul.u32 %s28, 8
        %s178 = smul.u32 %s27, 8
        %s179 = sadd.s32 %s177, %s178
        %s180 = sld [smem:[#allocation3 + %s179]]
        %p181 = scmp.gt.s32.totalorder %s180, 0
        %s182 = scalar_select %p181, %s180, 0
        %p183 = scmp.lt.s32.totalorder %s182, 63
        %s184 = scalar_select %p183, %s182, 63
        %s185 = scalar_lea.vmem [#allocation4], %s184
        %v186 = vld [vmem:[%s185] sm:$0x1]
        %187 = vst [vmem:[%s175] sm:$0x1] %v186
        %s188 = sadd.s32 %s179, 1
        %s189 = sld [smem:[#allocation3 + %s188]]
        %p190 = scmp.gt.s32.totalorder %s189, 0
        %s191 = scalar_select %p190, %s189, 0
        %p192 = scmp.lt.s32.totalorder %s191, 63
        %s193 = scalar_select %p192, %s191, 63
        %s194 = scalar_lea.vmem [#allocation4], %s193
        %v195 = vld [vmem:[%s194] sm:$0x1]
        %196 = vst [vmem:[%s175 + $0x1] sm:$0x1] %v195
        %s197 = sadd.s32 %s179, 2
        %s198 = sld [smem:[#allocation3 + %s197]]
        %p199 = scmp.gt.s32.totalorder %s198, 0
        %s200 = scalar_select %p199, %s198, 0
        %p201 = scmp.lt.s32.totalorder %s200, 63
        %s202 = scalar_select %p201, %s200, 63
        %s203 = scalar_lea.vmem [#allocation4], %s202
        %v204 = vld [vmem:[%s203] sm:$0x1]
        %205 = vst [vmem:[%s175 + $0x2] sm:$0x1] %v204
        %s206 = sadd.s32 %s179, 3
        %s207 = sld [smem:[#allocation3 + %s206]]
        %p208 = scmp.gt.s32.totalorder %s207, 0
        %s209 = scalar_select %p208, %s207, 0
        %p210 = scmp.lt.s32.totalorder %s209, 63
        %s211 = scalar_select %p210, %s209, 63
        %s212 = scalar_lea.vmem [#allocation4], %s211
        %v213 = vld [vmem:[%s212] sm:$0x1]
        %214 = vst [vmem:[%s175 + $0x3] sm:$0x1] %v213
        %s215 = sadd.s32 %s179, 4
        %s216 = sld [smem:[#allocation3 + %s215]]
        %p217 = scmp.gt.s32.totalorder %s216, 0
        %s218 = scalar_select %p217, %s216, 0
        %p219 = scmp.lt.s32.totalorder %s218, 63
        %s220 = scalar_select %p219, %s218, 63
        %s221 = scalar_lea.vmem [#allocation4], %s220
        %v222 = vld [vmem:[%s221] sm:$0x1]
        %223 = vst [vmem:[%s175 + $0x4] sm:$0x1] %v222
        %s224 = sadd.s32 %s179, 5
        %s225 = sld [smem:[#allocation3 + %s224]]
        %p226 = scmp.gt.s32.totalorder %s225, 0
        %s227 = scalar_select %p226, %s225, 0
        %p228 = scmp.lt.s32.totalorder %s227, 63
        %s229 = scalar_select %p228, %s227, 63
        %s230 = scalar_lea.vmem [#allocation4], %s229
        %v231 = vld [vmem:[%s230] sm:$0x1]
        %232 = vst [vmem:[%s175 + $0x5] sm:$0x1] %v231
        %s233 = sadd.s32 %s179, 6
        %s234 = sld [smem:[#allocation3 + %s233]]
        %p235 = scmp.gt.s32.totalorder %s234, 0
        %s236 = scalar_select %p235, %s234, 0
        %p237 = scmp.lt.s32.totalorder %s236, 63
        %s238 = scalar_select %p237, %s236, 63
        %s239 = scalar_lea.vmem [#allocation4], %s238
        %v240 = vld [vmem:[%s239] sm:$0x1]
        %241 = vst [vmem:[%s175 + $0x6] sm:$0x1] %v240
        %s242 = sadd.s32 %s179, 7
        %s243 = sld [smem:[#allocation3 + %s242]]
        %p244 = scmp.gt.s32.totalorder %s243, 0
        %s245 = scalar_select %p244, %s243, 0
        %p246 = scmp.lt.s32.totalorder %s245, 63
        %s247 = scalar_select %p246, %s245, 63
        %s248 = scalar_lea.vmem [#allocation4], %s247
        %v249 = vld [vmem:[%s248] sm:$0x1]
        %250 = vst [vmem:[%s175 + $0x7] sm:$0x1] %v249
        %v251 = vld [vmem:[%s175] sm:$0xff]
        %v252 = vld [vmem:[#allocation7] sm:$0xff]
        %v253 = vadd.f32 %v251, %v252
        %254 = vst [vmem:[%s175] sm:$0xff] %v253
        %s255 = sand.u32 %s92, 1
        %s256 = scalar_lea.sflag [#allocation6], %s255
        %s257 = sand.u32 %s92, 1
        %s258 = smul.addr %s257, 8
        %s259 = scalar_lea.vmem [#allocation9], %s258
        // Predicated region
        $region37: #{tpu_custom_call.1} parent=27 // pred_check
          %p260 = pneg %p102
        $region38: #{tpu_custom_call.1} parent=27 // pred_check_branch
          %262 = sbr.rel (%p260) target = $region40
        $region39: #{tpu_custom_call.1} parent=27 // pred_region
          %s263 = sadd.s32 %s28, %s27
          %s265 = ssub.s32 128, 128
          %266 = vsyncadd %s256, %s265
          %s267 = smul.addr %s263, 128
          %s268 = scalar_lea.hbm %s3, %s267
          %s270 = sshll.u32 %s259, 4
          %s271 = int_to_ptr.vmem [resolvable:$true] %s270
          %273 = dma.vmem_to_hbm [thread:$0]  %s271, 128, %s268, %s256
        $region40: #{tpu_custom_call.1} parent=27 // pred_fallthru
          _
      $region28: #{tpu_custom_call.1} parent=5 // pred_fallthru
        _
      %p274 = scmp.le.s32.totalorder 2, %s18
      // Predicated region
      $region41: #{tpu_custom_call.1} parent=5 // pred_check
        %p275 = pneg %p274
      $region42: #{tpu_custom_call.1} parent=5 // pred_check_branch
        %277 = sbr.rel (%p275) target = $region44
      $region43: #{tpu_custom_call.1} parent=5 // pred_region
        %s278 = ssub.s32 %s18, 2
        // Predicated region
        $region45: #{tpu_custom_call.1} parent=43 // pred_check
          %p279 = pneg %p108
        $region46: #{tpu_custom_call.1} parent=43 // pred_check_branch
          %281 = sbr.rel (%p279) target = $region48
        $region47: #{tpu_custom_call.1} parent=43 // pred_region
          %s282 = sand.u32 %s93, 1
          %s283 = scalar_lea.sflag [#allocation6], %s282
          %s284 = sand.u32 %s93, 1
          %s285 = smul.addr %s284, 8
          %s286 = scalar_lea.vmem [#allocation9], %s285
          %287 = dma.done %s283, 128
        $region48: #{tpu_custom_call.1} parent=43 // pred_fallthru
          _
      $region44: #{tpu_custom_call.1} parent=5 // pred_fallthru
        _
    $region6: #{tpu_custom_call.1} parent=1 // loop_footer
      %s22 = sadd.s32 1, %s18
    $region7: #{tpu_custom_call.1} parent=1 // loop_footer_branch
      %17 = sbr.rel target = $region3
    $region8: #{tpu_custom_call.1} parent=1 // loop_exit
      _
    %288 = vsyncpa [#allocation5], 1
    %s289 = scalar_lea.sflag [#allocation5], 1
    %290 = vsyncpa %s289, 1
    %291 = vsyncpa [#allocation8], 1
    %292 = vsyncpa [#allocation6], 1
    %s293 = scalar_lea.sflag [#allocation6], 1
    %294 = vsyncpa %s293, 1

</llo_original>
